<compile_context>
chip_gen: v6e
topology: v6e:2x2x1
jax: 0.10.0
libtpu: 0.0.40
codegen_flags: <defaults>
</compile_context>

<pallas_src>
from functools import partial

import numpy as np
import jax
import jax.numpy as jnp
from jax.experimental import pallas as pl
from jax.experimental.pallas import tpu as pltpu

LANE = 128


def _round_up(x, m):
    return ((x + m - 1) // m) * m


# ---------------------------------------------------------------------------
# Kernel
# ---------------------------------------------------------------------------
def _dnc_heads_kernel(x_ref, w_ref, b_ref, o_ref, *, bounds):
    """Fused Linear + grouped activations + grouped pi softmax.

    x_ref: (TB, D)      bf16 ctrl-input batch tile
    w_ref: (D, Gpad)    bf16 activation-grouped, lane-padded weight (resident)
    b_ref: (1, Gpad)    f32 matching bias
    o_ref: (TB, Gpad)   f32 activated output tile (one full-width store)

    `bounds` = cumulative padded ends (b_tanh, b_soft, b_sig, b_pi0, b_pi1,
    b_pi2); all are multiples of 128 so every slice below is vreg-aligned.
    """
    z = jnp.dot(x_ref[...], w_ref[...], preferred_element_type=jnp.float32)
    z = z + b_ref[...]

    b0, b1, b2, b3, b4, b5 = bounds

    g_tanh = jnp.tanh(z[:, 0:b0])
    g_soft = jnp.logaddexp(z[:, b0:b1], 0.0)        # softplus
    g_sig = jax.nn.sigmoid(z[:, b1:b2])

    # pi: softmax over 3 mixture components per read head (component-major,
    # lane-aligned blocks).  Exact divide (no approx reciprocal).
    p0 = z[:, b2:b3]
    p1 = z[:, b3:b4]
    p2 = z[:, b4:b5]
    m = jnp.maximum(jnp.maximum(p0, p1), p2)
    e0 = jnp.exp(p0 - m)
    e1 = jnp.exp(p1 - m)
    e2 = jnp.exp(p2 - m)
    inv = 1.0 / (e0 + e1 + e2)

    # Single full-width, unmasked store of the whole tile (padding lanes hold
    # harmless activation-of-zero values; the wrapper never reads them).
    out = jnp.concatenate([g_tanh, g_soft, g_sig, e0 * inv, e1 * inv, e2 * inv],
                          axis=1)
    o_ref[...] = out


# ---------------------------------------------------------------------------
# One-time parameter preparation (hoisted out of the per-timestep forward)
# ---------------------------------------------------------------------------
def prepare_dnc_heads_params(weight, bias, *, mem_dim, nbr_heads):
    """Permute + lane-pad the Linear params.  Call ONCE per parameter update.

    weight : (input_dim, head_gate_dim) f32 (transposed vs. PyTorch)
    bias   : (head_gate_dim,) f32
    """
    D, G = weight.shape
    M, H = mem_dim, nbr_heads
    HM = H * M

    # Original (PyTorch) flat-gate column layout.
    layout = [("kr", HM), ("betar", H), ("kw", M), ("betaw", 1),
              ("erase", M), ("write", M), ("ga", 1), ("gw", 1),
              ("f", H), ("pi", 3 * H)]
    offs, cur = {}, 0
    for name, n in layout:
        offs[name] = cur
        cur += n
    assert cur == G, (cur, G)

    def cols(name, n):
        return np.arange(offs[name], offs[name] + n)

    pi0 = offs["pi"] + 3 * np.arange(H)
    groups = [
        np.concatenate([cols("kr", HM), cols("kw", M), cols("write", M)]),  # tanh
        np.concatenate([cols("betar", H), cols("betaw", 1)]),               # softplus
        np.concatenate([cols("erase", M), cols("ga", 1),
                        cols("gw", 1), cols("f", H)]),                      # sigmoid
        pi0, pi0 + 1, pi0 + 2,                                              # pi comps
    ]
    widths = [_round_up(len(g), LANE) for g in groups]
    bounds = tuple(int(v) for v in np.cumsum(widths))
    starts = [0] + list(bounds[:-1])
    g_pad = bounds[-1]

    src = np.concatenate(groups).astype(np.int64)
    dst = np.concatenate([s + np.arange(len(g)) for s, g in zip(starts, groups)]
                         ).astype(np.int64)

    w_np = np.zeros((D, g_pad), np.float32)
    w_np[:, dst] = np.asarray(weight, np.float32)[:, src]
    b_np = np.zeros((1, g_pad), np.float32)
    b_np[0, dst] = np.asarray(bias, np.float32)[src]

    return {
        "w": jnp.asarray(w_np, dtype=jnp.bfloat16),   # bf16 MXU operand
        "b": jnp.asarray(b_np, dtype=jnp.float32),
        "bounds": bounds,
        "g_pad": g_pad,
        "input_dim": D,
        "mem_dim": M,
        "nbr_heads": H,
    }


def _choose_batch_tiling(B, batch_tile, min_grid_steps):
    ntiles = max(pl.cdiv(B, batch_tile), 1)
    if min_grid_steps > 1 and B >= 8 * min_grid_steps:
        ntiles = max(ntiles, min_grid_steps)   # let v7x shard the batch axis
    TB = _round_up(pl.cdiv(B, ntiles), 8)
    B_pad = ntiles * TB
    return TB, B_pad, ntiles


# ---------------------------------------------------------------------------
# Forward (per-timestep)
# ---------------------------------------------------------------------------
def basic_dnc_heads_forward(x, params, *, batch_tile=256, min_grid_steps=2):
    """Non-simplified BasicDNCHeads.forward.

    x      : (B, input_dim) float32 ctrl_inputs
    params : output of prepare_dnc_heads_params
    Returns dict matching the PyTorch module output
    (kr, betar, kw, betaw, erase, write, ga, gw, f, pi).
    """
    w_p, b_p = params["w"], params["b"]
    bounds, G_pad = params["bounds"], params["g_pad"]
    M, H, D = params["mem_dim"], params["nbr_heads"], params["input_dim"]
    HM = H * M

    B, Dx = x.shape
    assert Dx == D, (Dx, D)

    TB, B_pad, ntiles = _choose_batch_tiling(B, batch_tile, min_grid_steps)

    x_p = x.astype(jnp.bfloat16)
    if B_pad != B:
        x_p = jnp.pad(x_p, ((0, B_pad - B), (0, 0)))

    # VMEM budget: double-buffered x/out tiles + resident (double-buffered)
    # weight & bias.  Generous floor; capped so it fits every generation.
    needed = 2 * (TB * D * 2 + TB * G_pad * 4 + D * G_pad * 2 + G_pad * 4)
    vmem_limit = int(min(max(4 * needed, 32 << 20), 64 << 20))

    kernel = partial(_dnc_heads_kernel, bounds=bounds)

    act = pl.pallas_call(
        kernel,
        out_shape=jax.ShapeDtypeStruct((B_pad, G_pad), jnp.float32),
        grid=(ntiles,),
        in_specs=[
            pl.BlockSpec((TB, D), lambda i: (i, 0)),      # batch-tiled x
            pl.BlockSpec((D, G_pad), lambda i: (0, 0)),   # weight: VMEM-resident
            pl.BlockSpec((1, G_pad), lambda i: (0, 0)),   # bias:   VMEM-resident
        ],
        out_specs=pl.BlockSpec((TB, G_pad), lambda i: (i, 0)),
        compiler_params=pltpu.CompilerParams(
            dimension_semantics=("parallel",),
            vmem_limit_bytes=vmem_limit),
        cost_estimate=pl.CostEstimate(
            flops=2 * B_pad * D * G_pad,
            transcendentals=B_pad * G_pad,
            bytes_accessed=(2 * B_pad * D + 2 * D * G_pad + 4 * G_pad
                            + 4 * B_pad * G_pad)),
    )(x_p, w_p, b_p)

    act = act[:B]

    # Glue: slice the activation-grouped output into the addressing dict.
    # Relative order inside each group is preserved; all starts below are the
    # (padded) group boundaries, so no un-permutation is needed.
    b0, b1, b2, b3, b4, _ = bounds
    odict = {
        "kr": act[:, 0:HM].reshape(B, H, M),
        "kw": act[:, HM:HM + M].reshape(B, 1, M),
        "write": act[:, HM + M:HM + 2 * M].reshape(B, 1, M),
        "betar": act[:, b0:b0 + H].reshape(B, H, 1),
        "betaw": act[:, b0 + H:b0 + H + 1].reshape(B, 1, 1),
        "erase": act[:, b1:b1 + M].reshape(B, 1, M),
        "ga": act[:, b1 + M:b1 + M + 1].reshape(B, 1, 1),
        "gw": act[:, b1 + M + 1:b1 + M + 2].reshape(B, 1, 1),
        "f": act[:, b1 + M + 2:b1 + M + 2 + H].reshape(B, H, 1),
        "pi": jnp.stack([act[:, b2:b2 + H],
                         act[:, b3:b3 + H],
                         act[:, b4:b4 + H]], axis=-1),   # (B, H, 3)
    }
    return odict


# ---------------------------------------------------------------------------
# Pure-JAX reference (mirror of the PyTorch module, f32 throughout)
# ---------------------------------------------------------------------------
def _reference_forward(x, weight, bias, *, mem_dim, nbr_heads):
    M, H = mem_dim, nbr_heads
    z = x @ weight + bias
    s = 0

    def take(n):
        nonlocal s
        v = z[:, s:s + n]
        s += n
        return v

    out = {}
    out["kr"] = jnp.tanh(take(H * M)).reshape(-1, H, M)
    out["betar"] = jax.nn.softplus(take(H)).reshape(-1, H, 1)
    out["kw"] = jnp.tanh(take(M)).reshape(-1, 1, M)
    out["betaw"] = jax.nn.softplus(take(1)).reshape(-1, 1, 1)
    out["erase"] = jax.nn.sigmoid(take(M)).reshape(-1, 1, M)
    out["write"] = jnp.tanh(take(M)).reshape(-1, 1, M)
    out["ga"] = jax.nn.sigmoid(take(1)).reshape(-1, 1, 1)
    out["gw"] = jax.nn.sigmoid(take(1)).reshape(-1, 1, 1)
    out["f"] = jax.nn.sigmoid(take(H)).reshape(-1, H, 1)
    out["pi"] = jax.nn.softmax(take(3 * H).reshape(-1, H, 3), axis=-1)
    return out


if __name__ == "__main__":
    # Small, forward-consistent shapes.
    B = 2            # batch
    input_dim = 32   # ctrl hidden
    mem_dim = 16     # memory word size
    nbr_heads = 2    # read heads

    # head_gate_dim (non-simplified):
    #   H*M (kr) + H (betar) + M (kw) + 1 (betaw) + M (erase) + M (write)
    #   + 1 (ga) + 1 (gw) + H (f) + 3H (pi)
    head_gate_dim = (nbr_heads * mem_dim + 5 * nbr_heads + 3 * mem_dim + 3)

    key = jax.random.PRNGKey(0)
    kx, kw, kb = jax.random.split(key, 3)

    # Synthetic deterministic params (orthogonal * 1e-3 mirrors layer_init's
    # 'ortho' scheme; small random bias exercises the activations).
    weight = jax.nn.initializers.orthogonal()(
        kw, (input_dim, head_gate_dim), jnp.float32) * 0.001
    bias = 0.1 * jax.random.normal(kb, (head_gate_dim,), jnp.float32)
    x = jax.random.normal(kx, (B, input_dim), dtype=jnp.float32)

    # One-time param prep (hoisted out of the per-timestep forward path).
    params = prepare_dnc_heads_params(
        weight, bias, mem_dim=mem_dim, nbr_heads=nbr_heads)

    odict = basic_dnc_heads_forward(x, params)
    jax.block_until_ready(odict)

    # Correctness check vs. a pure-JAX f32 reference of the PyTorch module.
    # (Kernel matmul operands are bf16 -> tolerance 1e-2 absolute.)
    ref = _reference_forward(
        x, weight, bias, mem_dim=mem_dim, nbr_heads=nbr_heads)
    for k in ref:
        assert odict[k].shape == ref[k].shape, (k, odict[k].shape, ref[k].shape)
        err = float(jnp.max(jnp.abs(odict[k] - ref[k])))
        assert err < 1e-2, (k, err)

    print("KERNEL_OK")
</pallas_src>

<mosaic_0001>
module attributes {stable_mosaic.version = 11 : i64} {
  func.func @_dnc_heads_kernel(%arg0: i32, %arg1: memref<8x32xbf16, #tpu.memory_space<vmem>>, %arg2: memref<32x768xbf16, #tpu.memory_space<vmem>>, %arg3: memref<1x768xf32, #tpu.memory_space<vmem>>, %arg4: memref<8x768xf32, #tpu.memory_space<vmem>>) attributes {dimension_semantics = [#tpu.dimension_semantics<parallel>], iteration_bounds = array<i64: 1>, scalar_prefetch = 0 : i64, scratch_operands = 0 : i64, tpu.core_type = #tpu.core_type<tc>, window_params = [{transform_indices = @transform_0, window_bounds = array<i64: 8, 32>}, {pipeline_mode = #tpu.pipeline_mode<synchronous>, transform_indices = @transform_1, window_bounds = array<i64: 32, 768>}, {pipeline_mode = #tpu.pipeline_mode<synchronous>, transform_indices = @transform_2, window_bounds = array<i64: 1, 768>}, {transform_indices = @transform_3, window_bounds = array<i64: 8, 768>}]} {
    %c0 = arith.constant 0 : index
    %c0_0 = arith.constant 0 : index
    %0 = vector.load %arg1[%c0, %c0_0] : memref<8x32xbf16, #tpu.memory_space<vmem>>, vector<8x32xbf16>
    %c0_1 = arith.constant 0 : index
    %c0_2 = arith.constant 0 : index
    %1 = vector.load %arg2[%c0_1, %c0_2] : memref<32x768xbf16, #tpu.memory_space<vmem>>, vector<32x768xbf16>
    %cst = arith.constant dense<0.000000e+00> : vector<8x768xf32>
    %2 = tpu.matmul %0, %1, %cst {dimension_numbers = #tpu.dot_dimension_numbers<[1], [0], [0], [1], [0, 0, 1, 1], [], []>} : vector<8x32xbf16>, vector<32x768xbf16>, vector<8x768xf32> -> vector<8x768xf32>
    %c0_3 = arith.constant 0 : index
    %c0_4 = arith.constant 0 : index
    %3 = vector.load %arg3[%c0_3, %c0_4] : memref<1x768xf32, #tpu.memory_space<vmem>>, vector<1x768xf32>
    %4 = vector.broadcast %3 : vector<1x768xf32> to vector<8x768xf32>
    %5 = arith.addf %2, %4 : vector<8x768xf32>
    %6 = vector.extract_strided_slice %5 {offsets = [0, 0], sizes = [8, 128], strides = [1, 1]} : vector<8x768xf32> to vector<8x128xf32>
    %7 = math.tanh %6 : vector<8x128xf32>
    %8 = vector.extract_strided_slice %5 {offsets = [0, 128], sizes = [8, 128], strides = [1, 1]} : vector<8x768xf32> to vector<8x128xf32>
    %cst_5 = arith.constant 0.000000e+00 : f32
    %9 = vector.broadcast %cst_5 : f32 to vector<8x128xf32>
    %10 = arith.maximumf %8, %9 : vector<8x128xf32>
    %11 = vector.broadcast %cst_5 : f32 to vector<8x128xf32>
    %12 = arith.subf %8, %11 : vector<8x128xf32>
    %13 = arith.cmpf one, %12, %12 : vector<8x128xf32>
    %14 = vector.broadcast %cst_5 : f32 to vector<8x128xf32>
    %15 = arith.addf %8, %14 : vector<8x128xf32>
    %16 = math.absf %12 : vector<8x128xf32>
    %cst_6 = arith.constant 0.000000e+00 : f32
    %17 = vector.broadcast %cst_6 : f32 to vector<8x128xf32>
    %18 = arith.subf %17, %16 : vector<8x128xf32>
    %19 = math.exp %18 : vector<8x128xf32>
    %20 = math.log1p %19 : vector<8x128xf32>
    %21 = arith.addf %10, %20 : vector<8x128xf32>
    %22 = arith.select %13, %15, %21 : vector<8x128xi1>, vector<8x128xf32>
    %23 = vector.extract_strided_slice %5 {offsets = [0, 256], sizes = [8, 128], strides = [1, 1]} : vector<8x768xf32> to vector<8x128xf32>
    %24 = arith.negf %23 : vector<8x128xf32>
    %25 = math.exp %24 : vector<8x128xf32>
    %cst_7 = arith.constant 1.000000e+00 : f32
    %26 = vector.broadcast %cst_7 : f32 to vector<8x128xf32>
    %27 = arith.addf %26, %25 : vector<8x128xf32>
    %28 = arith.divf %26, %27 : vector<8x128xf32>
    %29 = vector.extract_strided_slice %5 {offsets = [0, 384], sizes = [8, 128], strides = [1, 1]} : vector<8x768xf32> to vector<8x128xf32>
    %30 = vector.extract_strided_slice %5 {offsets = [0, 512], sizes = [8, 128], strides = [1, 1]} : vector<8x768xf32> to vector<8x128xf32>
    %31 = vector.extract_strided_slice %5 {offsets = [0, 640], sizes = [8, 128], strides = [1, 1]} : vector<8x768xf32> to vector<8x128xf32>
    %32 = arith.maximumf %29, %30 : vector<8x128xf32>
    %33 = arith.maximumf %32, %31 : vector<8x128xf32>
    %34 = arith.subf %29, %33 : vector<8x128xf32>
    %35 = math.exp %34 : vector<8x128xf32>
    %36 = arith.subf %30, %33 : vector<8x128xf32>
    %37 = math.exp %36 : vector<8x128xf32>
    %38 = arith.subf %31, %33 : vector<8x128xf32>
    %39 = math.exp %38 : vector<8x128xf32>
    %40 = arith.addf %35, %37 : vector<8x128xf32>
    %41 = arith.addf %40, %39 : vector<8x128xf32>
    %cst_8 = arith.constant 1.000000e+00 : f32
    %42 = vector.broadcast %cst_8 : f32 to vector<8x128xf32>
    %43 = arith.divf %42, %41 : vector<8x128xf32>
    %44 = arith.mulf %35, %43 : vector<8x128xf32>
    %45 = arith.mulf %37, %43 : vector<8x128xf32>
    %46 = arith.mulf %39, %43 : vector<8x128xf32>
    %47 = tpu.concatenate %7, %22, %28, %44, %45, %46 in 1 : vector<8x128xf32>, vector<8x128xf32>, vector<8x128xf32>, vector<8x128xf32>, vector<8x128xf32>, vector<8x128xf32> -> vector<8x768xf32>
    %c0_9 = arith.constant 0 : index
    %c0_10 = arith.constant 0 : index
    %48 = vector.load %arg4[%c0_9, %c0_10] : memref<8x768xf32, #tpu.memory_space<vmem>>, vector<8x768xf32>
    tpu.vector_store %arg4[%c0_9, %c0_10], %47 {strides = array<i32>} : memref<8x768xf32, #tpu.memory_space<vmem>>, vector<8x768xf32>,
    return
  }
  func.func @transform_0(%arg0: i32) -> (i32, i32) {
    %c0_i32 = arith.constant 0 : i32
    %c0_i32_0 = arith.constant 0 : i32
    return %arg0, %c0_i32 : i32, i32
  }
  func.func @transform_1(%arg0: i32) -> (i32, i32) {
    %c0_i32 = arith.constant 0 : i32
    %c0_i32_0 = arith.constant 0 : i32
    %c0_i32_1 = arith.constant 0 : i32
    return %c0_i32, %c0_i32_0 : i32, i32
  }
  func.func @transform_2(%arg0: i32) -> (i32, i32) {
    %c0_i32 = arith.constant 0 : i32
    %c0_i32_0 = arith.constant 0 : i32
    %c0_i32_1 = arith.constant 0 : i32
    return %c0_i32, %c0_i32_0 : i32, i32
  }
  func.func @transform_3(%arg0: i32) -> (i32, i32) {
    %c0_i32 = arith.constant 0 : i32
    %c0_i32_0 = arith.constant 0 : i32
    return %arg0, %c0_i32 : i32, i32
  }
}

</mosaic_0001>

<llo_original>
// kernel: tpu_custom_call.1
$region0: #{tpu_custom_call.1}
  #allocation0 [shape = 'u32[]', space=smem, size = 0x4, offset = 0x4, fixed_abs, tag = 'smem constant byte address 0x4 - core index']
  #allocation1 [shape = 'u32[144,128]{1,0:T(1,128)}', space=vmem, size = 0x12000, scoped, tag = 'internal scratch']
  %s0 = inlined_call_operand.hbm [shape: bf16[8,32], index: 0, kind: input, shape index: {}]
  %s1 = inlined_call_operand.hbm [shape: bf16[32,768], index: 1, kind: input, shape index: {}]
  %s2 = inlined_call_operand.hbm [shape: f32[1,768], index: 2, kind: input, shape index: {}]
  %s3 = inlined_call_operand.hbm [shape: f32[8,768], index: 3, kind: output, shape index: {}]
  %s4 = sld [smem:[#allocation0]]
  $region34: #{tpu_custom_call.1} parent=0
    _
  %s6 = ssub.s32 1, %s4
  %s7 = scalar_select 0, %s6, %s4
  $region1: #{tpu_custom_call.1} parent=0
    #allocation2 [shape = 'u8[2048]{0}', space=vmem, size = 0x800, scoped, tag = 'input window, operand 0, single buffered']
    #allocation3 [shape = 's32[1]{0}', space=sflag, size = 0x4, scoped, tag = 'scoped memory for tpu_custom_call.1']
    #allocation4 [shape = 's32[1]{0}', space=sflag, size = 0x4, scoped, tag = 'scoped memory for tpu_custom_call.1']
    #allocation5 [shape = 'u8[49152]{0}', space=vmem, size = 0xc000, scoped, tag = 'input window, operand 1, single buffered']
    #allocation6 [shape = 's32[1]{0}', space=sflag, size = 0x4, scoped, tag = 'scoped memory for tpu_custom_call.1']
    #allocation7 [shape = 'u8[3072]{0}', space=vmem, size = 0xc00, scoped, tag = 'input window, operand 2, single buffered']
    #allocation8 [shape = 'u8[24576]{0}', space=vmem, size = 0x6000, scoped, tag = 'output window, operand 0, single buffered']
    %8 = vsyncpa [#allocation3], 0
    %9 = vsyncpa [#allocation6], 0
    %10 = vsyncpa [#allocation4], 0
    // Predicated region
    $region2: #{tpu_custom_call.1} parent=1 // pred_check
      _
    $region3: #{tpu_custom_call.1} parent=1 // pred_check_branch
      %12 = sbr.rel (0) target = $region5
    $region4: #{tpu_custom_call.1} parent=1 // pred_region
      %s14 = ssub.s32 64, 64
      %15 = vsyncadd [#allocation3], %s14
      %s17 = sshll.u32 [#allocation2], 4
      %s18 = int_to_ptr.vmem [resolvable:$true] %s17
      %20 = dma.hbm_to_vmem [thread:$0]  %s0, 64, %s18, [#allocation3]
    $region5: #{tpu_custom_call.1} parent=1 // pred_fallthru
      _
    // Predicated region
    $region6: #{tpu_custom_call.1} parent=1 // pred_check
      _
    $region7: #{tpu_custom_call.1} parent=1 // pred_check_branch
      %22 = sbr.rel (0) target = $region9
    $region8: #{tpu_custom_call.1} parent=1 // pred_region
      %s24 = ssub.s32 1536, 1536
      %25 = vsyncadd [#allocation6], %s24
      %s26 = sshll.u32 [#allocation5], 4
      %s27 = int_to_ptr.vmem [resolvable:$true] %s26
      %32 = dma.hbm_to_vmem [thread:$0]  %s1, 1536, %s27, [#allocation6], 384, 384, 24
    $region9: #{tpu_custom_call.1} parent=1 // pred_fallthru
      _
    // Predicated region
    $region10: #{tpu_custom_call.1} parent=1 // pred_check
      _
    $region11: #{tpu_custom_call.1} parent=1 // pred_check_branch
      %34 = sbr.rel (0) target = $region13
    $region12: #{tpu_custom_call.1} parent=1 // pred_region
      %s36 = ssub.s32 96, 96
      %37 = vsyncadd [#allocation6], %s36
      %s39 = sshll.u32 [#allocation7], 4
      %s40 = int_to_ptr.vmem [resolvable:$true] %s39
      %42 = dma.hbm_to_vmem [thread:$0]  %s2, 96, %s40, [#allocation6]
    $region13: #{tpu_custom_call.1} parent=1 // pred_fallthru
      _
    // Predicated region
    $region14: #{tpu_custom_call.1} parent=1 // pred_check
      _
    $region15: #{tpu_custom_call.1} parent=1 // pred_check_branch
      %44 = sbr.rel (0) target = $region17
    $region16: #{tpu_custom_call.1} parent=1 // pred_region
      %45 = dma.done [#allocation3], 64
    $region17: #{tpu_custom_call.1} parent=1 // pred_fallthru
      _
    // Predicated region
    $region18: #{tpu_custom_call.1} parent=1 // pred_check
      _
    $region19: #{tpu_custom_call.1} parent=1 // pred_check_branch
      %47 = sbr.rel (0) target = $region21
    $region20: #{tpu_custom_call.1} parent=1 // pred_region
      %48 = dma.done [#allocation6], 1536
    $region21: #{tpu_custom_call.1} parent=1 // pred_fallthru
      _
    // Predicated region
    $region22: #{tpu_custom_call.1} parent=1 // pred_check
      _
    $region23: #{tpu_custom_call.1} parent=1 // pred_check_branch
      %50 = sbr.rel (0) target = $region25
    $region24: #{tpu_custom_call.1} parent=1 // pred_region
      %51 = dma.done [#allocation6], 96
    $region25: #{tpu_custom_call.1} parent=1 // pred_fallthru
      _
    %v53 = vld [vmem:[#allocation2] sm:$0xf]
    %v54 = vld [vmem:[#allocation5] sm:$0xff]
    %v55 = vld [vmem:[#allocation5 + $0x8] sm:$0xff]
    %v56 = vld [vmem:[#allocation5 + $0x10] sm:$0xff]
    %v57 = vld [vmem:[#allocation5 + $0x18] sm:$0xff]
    %v58 = vld [vmem:[#allocation5 + $0x20] sm:$0xff]
    %v59 = vld [vmem:[#allocation5 + $0x28] sm:$0xff]
    %v60 = vld [vmem:[#allocation5 + $0x30] sm:$0xff]
    %v61 = vld [vmem:[#allocation5 + $0x38] sm:$0xff]
    %v62 = vld [vmem:[#allocation5 + $0x40] sm:$0xff]
    %v63 = vld [vmem:[#allocation5 + $0x48] sm:$0xff]
    %v64 = vld [vmem:[#allocation5 + $0x50] sm:$0xff]
    %v65 = vld [vmem:[#allocation5 + $0x58] sm:$0xff]
    %v66 = vld [vmem:[#allocation7] sm:$0x3f]
    %v68 = vlaneseq
    %v69 = vshrl.u32 %v68, 7
    %v70 = vsub.s32 0, %v69
    %v71 = vrot.slane %v66, %v70
    %v72 = vlaneseq
    %v73 = vshrl.u32 %v72, 7
    %v74 = vsub.s32 1, %v73
    %v75 = vrot.slane %v66, %v74
    %v76 = vlaneseq
    %v77 = vshrl.u32 %v76, 7
    %v78 = vsub.s32 2, %v77
    %v79 = vrot.slane %v66, %v78
    %v80 = vlaneseq
    %v81 = vshrl.u32 %v80, 7
    %v82 = vsub.s32 3, %v81
    %v83 = vrot.slane %v66, %v82
    %v84 = vlaneseq
    %v85 = vshrl.u32 %v84, 7
    %v86 = vsub.s32 4, %v85
    %v87 = vrot.slane %v66, %v86
    %v88 = vlaneseq
    %v89 = vshrl.u32 %v88, 7
    %v90 = vsub.s32 5, %v89
    %v91 = vrot.slane %v66, %v90
    %v110 = vunpack.c.l.b16 %v54
    %v111 = vunpack.c.h.b16 %v54
    %v112 = vunpack.c.l.b16 %v55
    %v113 = vunpack.c.h.b16 %v55
    %v114 = vunpack.c.l.b16 %v56
    %v115 = vunpack.c.h.b16 %v56
    %v116 = vunpack.c.l.b16 %v57
    %v117 = vunpack.c.h.b16 %v57
    %v118 = vunpack.c.l.b16 %v58
    %v119 = vunpack.c.h.b16 %v58
    %v120 = vunpack.c.l.b16 %v59
    %v121 = vunpack.c.h.b16 %v59
    %v122 = vunpack.c.l.b16 %v60
    %v123 = vunpack.c.h.b16 %v60
    %v124 = vunpack.c.l.b16 %v61
    %v125 = vunpack.c.h.b16 %v61
    %v126 = vunpack.c.l.b16 %v62
    %v127 = vunpack.c.h.b16 %v62
    %v128 = vunpack.c.l.b16 %v63
    %v129 = vunpack.c.h.b16 %v63
    %v130 = vunpack.c.l.b16 %v64
    %v131 = vunpack.c.h.b16 %v64
    %v132 = vunpack.c.l.b16 %v65
    %v133 = vunpack.c.h.b16 %v65
    %v134 = vpack.c.b16 %v116, %v110
    %v135 = vpack.c.b16 %v117, %v111
    %v136 = vpack.c.b16 %v118, %v112
    %v137 = vpack.c.b16 %v119, %v113
    %v138 = vpack.c.b16 %v120, %v114
    %v139 = vpack.c.b16 %v121, %v115
    %v140 = vpack.c.b16 %v128, %v122
    %v141 = vpack.c.b16 %v129, %v123
    %v142 = vpack.c.b16 %v130, %v124
    %v143 = vpack.c.b16 %v131, %v125
    %v144 = vpack.c.b16 %v132, %v126
    %v145 = vpack.c.b16 %v133, %v127
    %vm158 = vcmask 261120
    %v160 = vsel %vm158, %v53, 0
    %162 = vmatprep.subr.bf16.mxu0 0
    %163 = vmatpush1.bf16.msra.mxu0 0
    %164 = vmatprep.subr.bf16.mxu0 0
    %165 = vmatpush1.bf16.msra.mxu0 0
    %166 = vmatprep.subr.bf16.mxu0 0
    %167 = vmatpush1.bf16.msra.mxu0 0
    %168 = vmatprep.subr.bf16.mxu0 0
    %169 = vmatpush1.bf16.msra.mxu0 0
    %170 = vmatprep.subr.bf16.mxu0 0
    %171 = vmatpush1.bf16.msra.mxu0 0
    %172 = vmatprep.subr.bf16.mxu0 0
    %173 = vmatpush1.bf16.msra.mxu0 0
    %174 = vmatprep.subr.bf16.mxu0 %v141
    %175 = vmatpush1.bf16.msra.mxu0 %v140
    %176 = vmatprep.subr.bf16.mxu0 %v135
    %177 = vmatpush1.bf16.msra.mxu0 %v134
    %178 = vmatprep.subr.bf16.mxu0 0
    %179 = vmatpush2.bf16.msra.mxu0 0
    %180 = vmatprep.subr.bf16.mxu0 0
    %181 = vmatpush2.bf16.msra.mxu0 0
    %182 = vmatprep.subr.bf16.mxu0 0
    %183 = vmatpush2.bf16.msra.mxu0 0
    %184 = vmatprep.subr.bf16.mxu0 0
    %185 = vmatpush2.bf16.msra.mxu0 0
    %186 = vmatprep.subr.bf16.mxu0 0
    %187 = vmatpush2.bf16.msra.mxu0 0
    %188 = vmatprep.subr.bf16.mxu0 0
    %189 = vmatpush2.bf16.msra.mxu0 0
    %190 = vmatprep.subr.bf16.mxu0 0
    %191 = vmatpush2.bf16.msra.mxu0 0
    %192 = vmatprep.subr.bf16.mxu0 0
    %193 = vmatpush2.bf16.msra.mxu0 0
    %194 = vmatprep.mubr.bf16.mxu0 0
    %195 = vmatmul.mubr.bf16.gmra.mxu0 %v160
    %v196 = vpop.f32.mrf.mxu0
    %v197 = vadd.f32 %v71, %v196
    %v198 = vpop.f32.mrf.mxu0
    %v199 = vadd.f32 %v75, %v198
    %v200 = vpop.f32.mrf.mxu0
    %v201 = vpop.f32.mrf.mxu0
    %202 = vdwg.mxu0
    %203 = vmatprep.subr.bf16.mxu0 0
    %204 = vmatpush1.bf16.msra.mxu0 0
    %205 = vmatprep.subr.bf16.mxu0 0
    %206 = vmatpush1.bf16.msra.mxu0 0
    %207 = vmatprep.subr.bf16.mxu0 0
    %208 = vmatpush1.bf16.msra.mxu0 0
    %209 = vmatprep.subr.bf16.mxu0 0
    %210 = vmatpush1.bf16.msra.mxu0 0
    %211 = vmatprep.subr.bf16.mxu0 0
    %212 = vmatpush1.bf16.msra.mxu0 0
    %213 = vmatprep.subr.bf16.mxu0 0
    %214 = vmatpush1.bf16.msra.mxu0 0
    %215 = vmatprep.subr.bf16.mxu0 %v143
    %216 = vmatpush1.bf16.msra.mxu0 %v142
    %217 = vmatprep.subr.bf16.mxu0 %v137
    %218 = vmatpush1.bf16.msra.mxu0 %v136
    %219 = vmatprep.subr.bf16.mxu0 0
    %220 = vmatpush2.bf16.msra.mxu0 0
    %221 = vmatprep.subr.bf16.mxu0 0
    %222 = vmatpush2.bf16.msra.mxu0 0
    %223 = vmatprep.subr.bf16.mxu0 0
    %224 = vmatpush2.bf16.msra.mxu0 0
    %225 = vmatprep.subr.bf16.mxu0 0
    %226 = vmatpush2.bf16.msra.mxu0 0
    %227 = vmatprep.subr.bf16.mxu0 0
    %228 = vmatpush2.bf16.msra.mxu0 0
    %229 = vmatprep.subr.bf16.mxu0 0
    %230 = vmatpush2.bf16.msra.mxu0 0
    %231 = vmatprep.subr.bf16.mxu0 0
    %232 = vmatpush2.bf16.msra.mxu0 0
    %233 = vmatprep.subr.bf16.mxu0 0
    %234 = vmatpush2.bf16.msra.mxu0 0
    %235 = vmatprep.mubr.bf16.mxu0 0
    %236 = vmatmul.mubr.bf16.gmra.mxu0 %v160
    %v237 = vpop.f32.mrf.mxu0
    %v238 = vadd.f32 %v79, %v237
    %v239 = vpop.f32.mrf.mxu0
    %v240 = vadd.f32 %v83, %v239
    %v241 = vpop.f32.mrf.mxu0
    %v242 = vpop.f32.mrf.mxu0
    %243 = vdwg.mxu0
    %244 = vmatprep.subr.bf16.mxu0 0
    %245 = vmatpush1.bf16.msra.mxu0 0
    %246 = vmatprep.subr.bf16.mxu0 0
    %247 = vmatpush1.bf16.msra.mxu0 0
    %248 = vmatprep.subr.bf16.mxu0 0
    %249 = vmatpush1.bf16.msra.mxu0 0
    %250 = vmatprep.subr.bf16.mxu0 0
    %251 = vmatpush1.bf16.msra.mxu0 0
    %252 = vmatprep.subr.bf16.mxu0 0
    %253 = vmatpush1.bf16.msra.mxu0 0
    %254 = vmatprep.subr.bf16.mxu0 0
    %255 = vmatpush1.bf16.msra.mxu0 0
    %256 = vmatprep.subr.bf16.mxu0 %v145
    %257 = vmatpush1.bf16.msra.mxu0 %v144
    %258 = vmatprep.subr.bf16.mxu0 %v139
    %259 = vmatpush1.bf16.msra.mxu0 %v138
    %260 = vmatprep.subr.bf16.mxu0 0
    %261 = vmatpush2.bf16.msra.mxu0 0
    %262 = vmatprep.subr.bf16.mxu0 0
    %263 = vmatpush2.bf16.msra.mxu0 0
    %264 = vmatprep.subr.bf16.mxu0 0
    %265 = vmatpush2.bf16.msra.mxu0 0
    %266 = vmatprep.subr.bf16.mxu0 0
    %267 = vmatpush2.bf16.msra.mxu0 0
    %268 = vmatprep.subr.bf16.mxu0 0
    %269 = vmatpush2.bf16.msra.mxu0 0
    %270 = vmatprep.subr.bf16.mxu0 0
    %271 = vmatpush2.bf16.msra.mxu0 0
    %272 = vmatprep.subr.bf16.mxu0 0
    %273 = vmatpush2.bf16.msra.mxu0 0
    %274 = vmatprep.subr.bf16.mxu0 0
    %275 = vmatpush2.bf16.msra.mxu0 0
    %276 = vmatprep.mubr.bf16.mxu0 0
    %277 = vmatmul.mubr.bf16.gmra.mxu0 %v160
    %v278 = vpop.f32.mrf.mxu0
    %v279 = vadd.f32 %v87, %v278
    %v280 = vpop.f32.mrf.mxu0
    %v281 = vadd.f32 %v91, %v280
    %v282 = vpop.f32.mrf.mxu0
    %v283 = vpop.f32.mrf.mxu0
    %284 = vdwg.mxu0
    %v285 = vtanh.pop %v197
    %v286 = vmax.f32 %v199, 0.0
    %vm287 = vcmp.ne.f32.partialorder %v199, %v199
    %v288 = vadd.f32 %v199, 0.0
    %v289 = vand.u32 2147483647, %v199
    %v290 = vsub.f32 0.0, %v289
    %v291 = vmul.f32 %v290, 1.442695
    %v292 = vpow.pop %v291
    %v293 = vadd.f32 %v292, 1.0
    %v294 = vlog2.pop %v293
    %v295 = vmul.f32 %v294, 0.6931472
    %v296 = vmul.f32 -0.5, %v292
    %v297 = vadd.f32 %v296, 1.0
    %v298 = vmul.f32 %v297, %v292
    %v299 = vand.u32 2147483647, %v292
    %vm300 = vcmp.lt.f32.partialorder %v299, 0.0004427343
    %v301 = vsel %vm300, %v298, %v295
    %v302 = vadd.f32 %v286, %v301
    %v303 = vsel %vm287, %v288, %v302
    %v304 = vxor.u32 %v238, 2147483648
    %v305 = vmul.f32 %v304, 1.442695
    %v306 = vpow.pop %v305
    %v307 = vadd.f32 %v306, 1.0
    %v308 = vrcp.pop %v307
    %v309 = vmul.f32 1.0, %v308
    %v310 = vmax.f32 %v240, %v279
    %v311 = vmax.f32 %v310, %v281
    %v312 = vsub.f32 %v240, %v311
    %v313 = vmul.f32 %v312, 1.442695
    %v314 = vpow.pop %v313
    %v315 = vsub.f32 %v279, %v311
    %v316 = vmul.f32 %v315, 1.442695
    %v317 = vpow.pop %v316
    %v318 = vsub.f32 %v281, %v311
    %v319 = vmul.f32 %v318, 1.442695
    %v320 = vpow.pop %v319
    %v321 = vadd.f32 %v314, %v317
    %v322 = vadd.f32 %v321, %v320
    %v323 = vrcp.pop %v322
    %v324 = vmul.f32 1.0, %v323
    %v325 = vmul.f32 %v314, %v324
    %v326 = vmul.f32 %v317, %v324
    %v327 = vmul.f32 %v320, %v324
    %328 = vst [vmem:[#allocation8] sm:$0xff] %v285
    %329 = vst [vmem:[#allocation8 + $0x8] sm:$0xff] %v303
    %330 = vst [vmem:[#allocation8 + $0x10] sm:$0xff] %v309
    %331 = vst [vmem:[#allocation8 + $0x18] sm:$0xff] %v325
    %332 = vst [vmem:[#allocation8 + $0x20] sm:$0xff] %v326
    %333 = vst [vmem:[#allocation8 + $0x28] sm:$0xff] %v327
    // Predicated region
    $region26: #{tpu_custom_call.1} parent=1 // pred_check
      _
    $region27: #{tpu_custom_call.1} parent=1 // pred_check_branch
      %335 = sbr.rel (0) target = $region29
    $region28: #{tpu_custom_call.1} parent=1 // pred_region
      %s337 = ssub.s32 768, 768
      %338 = vsyncadd [#allocation4], %s337
      %s340 = sshll.u32 [#allocation8], 4
      %s341 = int_to_ptr.vmem [resolvable:$true] %s340
      %343 = dma.vmem_to_hbm [thread:$0]  %s341, 768, %s3, [#allocation4]
    $region29: #{tpu_custom_call.1} parent=1 // pred_fallthru
      _
    // Predicated region
    $region30: #{tpu_custom_call.1} parent=1 // pred_check
      _
    $region31: #{tpu_custom_call.1} parent=1 // pred_check_branch
      %345 = sbr.rel (0) target = $region33
    $region32: #{tpu_custom_call.1} parent=1 // pred_region
      %346 = dma.done [#allocation4], 768
    $region33: #{tpu_custom_call.1} parent=1 // pred_fallthru
      _
    %347 = vsyncpa [#allocation3], 1
    %348 = vsyncpa [#allocation6], 1
    %349 = vsyncpa [#allocation4], 1

</llo_original>
